<compile_context>
chip_gen: v7x
topology: tpu7x:2x2x1
jax: 0.10.0
libtpu: 0.0.40
codegen_flags: <defaults>
</compile_context>

<pallas_src>
import functools

import jax
import jax.numpy as jnp
from jax.experimental import pallas as pl
from jax.experimental.pallas import tpu as pltpu


_LANE = 128
_PALLAS_MIN_BYTES = 512 * 1024  # below this, let XLA fuse the mean


def _round_up(x, m):
    return ((x + m - 1) // m) * m


def _sublane_pack(dtype):
    """Sublane tile height for a dtype: 8 for 4-byte, 16 for 2-byte, 32 for 1-byte."""
    itemsize = jnp.dtype(dtype).itemsize
    return 8 * max(1, 4 // itemsize)


@functools.lru_cache(maxsize=1)
def _vmem_capacity_bytes():
    """Per-core VMEM capacity; conservative (v7x) fallback if the query fails."""
    try:
        cap = int(getattr(pltpu.get_tpu_info(), "vmem_capacity_bytes"))
        if cap > 0:
            return cap
    except Exception:
        pass
    return 64 * 1024 * 1024


def _pick_b_tile(B, T, C, dtype, input_budget_bytes):
    """Largest safe batch tile.  Returns (b_tile, padded_bytes_per_row).

    b_tile == 0 signals "a single padded row already exceeds the budget" and the
    caller should fall back to XLA (avoids the latent compile failure for huge T*C).
    """
    itemsize = jnp.dtype(dtype).itemsize
    pack = _sublane_pack(dtype)
    # Real VMEM footprint of one (1, T, C) row: minor dims are stored in
    # (pack, 128) tiles, so account for sublane/lane padding.
    per_row = max(1, _round_up(T, pack) * _round_up(C, _LANE) * itemsize)

    b_tile = min(B, max(0, input_budget_bytes // per_row))
    if b_tile >= B:
        return B, per_row          # one full-batch block (full-dim => always valid)
    # Tiled path: the output block is (b_tile, C), so b_tile (second-to-last dim)
    # must be a multiple of 8.
    b_tile = (b_tile // 8) * 8
    if b_tile < 8:
        return 0, per_row          # can't tile safely -> XLA fallback
    if B % b_tile != 0:
        # Prefer a divisor of B (no masked edge block) if it stays within ~2x.
        d = b_tile
        while d >= max(8, b_tile // 2):
            if B % d == 0 and d % 8 == 0:
                return d, per_row
            d -= 8
        # Otherwise accept a single masked edge block (cheaper than tiny tiles).
    return b_tile, per_row


def _avg_consensus_kernel(x_ref, o_ref, *, inv_t):
    """x_ref: (b_tile, T, C)  ->  o_ref: (b_tile, C) = mean over T (f32 accumulation)."""
    s = jnp.sum(x_ref[...], axis=1, dtype=jnp.float32)   # widening fused into reduce
    o_ref[...] = (s * jnp.float32(inv_t)).astype(o_ref.dtype)


@jax.jit
def _segment_mean_pallas(x):
    """mean over axis=1 with keepdim=True.  x: (B, T, C) -> (B, 1, C)."""
    B, T, C = x.shape
    dtype = x.dtype
    itemsize = jnp.dtype(dtype).itemsize
    pack = _sublane_pack(dtype)

    vmem_cap = _vmem_capacity_bytes()
    # Input-block budget: large enough to amortize ~0.35us grid steps, small
    # enough that 2x input + 2x output blocks sit well under scoped VMEM on
    # every generation (v6e/v5e: 12 MiB, v7x: 8 MiB).
    input_budget = min(12 << 20, vmem_cap // 8)

    b_tile, per_row_bytes = _pick_b_tile(B, T, C, dtype, input_budget)
    if b_tile == 0:
        # A single padded (1, T, C) row exceeds the budget; let XLA handle it.
        # TODO(synk): add a C-tiling grid axis for pathologically large T*C rows.
        return jnp.mean(x, axis=1, keepdims=True)

    # v7x has 2 TensorCores: give the grid >= 2 parallel steps when the whole
    # batch would otherwise fit one block (no-op cost on 1-TC v5e/v6e).
    if b_tile >= B and B >= 16:
        half = _round_up(pl.cdiv(B, 2), 8)
        if half < B:
            b_tile = half

    grid = (pl.cdiv(B, b_tile),)

    in_block_bytes = b_tile * per_row_bytes
    out_block_bytes = _round_up(b_tile, pack) * _round_up(C, _LANE) * itemsize
    vmem_limit = 2 * in_block_bytes + 2 * out_block_bytes + (4 << 20)
    vmem_limit = int(min(max(vmem_limit, 16 << 20), (vmem_cap * 3) // 4))

    cost = pl.CostEstimate(
        flops=B * T * C,
        transcendentals=0,
        bytes_accessed=B * T * C * itemsize + B * C * itemsize,
    )

    out2d = pl.pallas_call(
        functools.partial(_avg_consensus_kernel, inv_t=1.0 / T),
        out_shape=jax.ShapeDtypeStruct((B, C), dtype),
        grid_spec=pltpu.PrefetchScalarGridSpec(
            num_scalar_prefetch=0,
            grid=grid,
            # (T, C) equal the full array dims -> valid tiling; whole reduction
            # axis resident per grid step.
            in_specs=[pl.BlockSpec((b_tile, T, C), lambda b: (b, 0, 0))],
            # 2-D lane-dense output block: unmasked stores, no 1->8 sublane padding.
            out_specs=pl.BlockSpec((b_tile, C), lambda b: (b, 0)),
        ),
        compiler_params=pltpu.CompilerParams(
            dimension_semantics=("parallel",),   # batch tiles are independent
            vmem_limit_bytes=vmem_limit,
        ),
        cost_estimate=cost,
    )(x)
    return out2d.reshape(B, 1, C)   # free reshape back to keepdim form


def segment_mean(x, *, force_pallas=False):
    """Dispatch: Pallas for feature-sized inputs, fused XLA mean for tiny ones."""
    if x.ndim != 3:
        return jnp.mean(x, axis=1, keepdims=True)
    B, T, C = x.shape
    if not force_pallas and B * T * C * jnp.dtype(x.dtype).itemsize < _PALLAS_MIN_BYTES:
        return jnp.mean(x, axis=1, keepdims=True)
    return _segment_mean_pallas(x)


class ConsensusModule:
    """JAX/Pallas port of the PyTorch ConsensusModule (TSM segment consensus)."""

    def __init__(self, consensus_type, dim=1):
        self.consensus_type = consensus_type if consensus_type != "rnn" else "identity"
        self.dim = dim

    def __call__(self, x):
        if self.consensus_type == "avg":
            if self.dim == 1 and x.ndim == 3:
                return segment_mean(x)
            # TSM always reduces dim=1 on (B, T, C); other layouts fall back to XLA.
            return jnp.mean(x, axis=self.dim, keepdims=True)
        elif self.consensus_type == "identity":
            return x
        else:
            return None  # matches the PyTorch reference


if __name__ == "__main__":
    key = jax.random.PRNGKey(0)

    # TSM-style logits: (batch, num_segments, num_classes)
    x = jax.random.normal(key, (2, 8, 32), dtype=jnp.float32)
    ref = jnp.mean(x, axis=1, keepdims=True)

    # 1) Force the Pallas kernel on the small demo input (single full-batch block).
    out = jax.block_until_ready(segment_mean(x, force_pallas=True))
    assert out.shape == (2, 1, 32), out.shape
    assert jnp.allclose(out, ref, atol=1e-5, rtol=1e-5), "mismatch vs reference mean"

    # 2) Module call (tiny input -> fused XLA fast path; same semantics).
    mod_avg = ConsensusModule("avg", dim=1)
    out_mod = jax.block_until_ready(mod_avg(x))
    assert out_mod.shape == (2, 1, 32)
    assert jnp.allclose(out_mod, ref, atol=1e-5, rtol=1e-5)

    # 3) Larger batch in bf16: exercises 8-aligned batch tiling, the >=2-step
    #    v7x split, a masked edge block, and sublane-packed layout accounting.
    x2 = jax.random.normal(jax.random.PRNGKey(0), (24, 8, 256), dtype=jnp.bfloat16)
    out2 = jax.block_until_ready(segment_mean(x2, force_pallas=True))
    ref2 = jnp.mean(x2.astype(jnp.float32), axis=1, keepdims=True)
    assert out2.shape == (24, 1, 256), out2.shape
    assert jnp.allclose(out2.astype(jnp.float32), ref2, atol=2e-2, rtol=2e-2)

    # 4) identity / rnn pass-through paths.
    mod_id = ConsensusModule("rnn", dim=1)  # remapped to 'identity'
    out_id = jax.block_until_ready(mod_id(x))
    assert out_id.shape == x.shape and jnp.array_equal(out_id, x)

    print("KERNEL_OK")
</pallas_src>

<mosaic_0001>
module attributes {stable_mosaic.version = 11 : i64} {
  func.func @_avg_consensus_kernel(%arg0: i32, %arg1: memref<2x8x32xf32, #tpu.memory_space<vmem>>, %arg2: memref<2x32xf32, #tpu.memory_space<vmem>>) attributes {dimension_semantics = [#tpu.dimension_semantics<parallel>], iteration_bounds = array<i64: 1>, scalar_prefetch = 0 : i64, scratch_operands = 0 : i64, tpu.core_type = #tpu.core_type<tc>, window_params = [{transform_indices = @transform_0, window_bounds = array<i64: 2, 8, 32>}, {transform_indices = @transform_1, window_bounds = array<i64: 2, 32>}]} {
    %c0 = arith.constant 0 : index
    %c0_0 = arith.constant 0 : index
    %c0_1 = arith.constant 0 : index
    %0 = vector.load %arg1[%c0, %c0_0, %c0_1] : memref<2x8x32xf32, #tpu.memory_space<vmem>>, vector<2x8x32xf32>
    %cst = arith.constant dense<0.000000e+00> : vector<2x32xf32>
    %1 = vector.multi_reduction <add>, %0, %cst [1] : vector<2x8x32xf32> to vector<2x32xf32>
    %cst_2 = arith.constant 1.250000e-01 : f32
    %2 = vector.broadcast %cst_2 : f32 to vector<2x32xf32>
    %3 = arith.mulf %1, %2 : vector<2x32xf32>
    %c0_3 = arith.constant 0 : index
    %c0_4 = arith.constant 0 : index
    %4 = vector.load %arg2[%c0_3, %c0_4] : memref<2x32xf32, #tpu.memory_space<vmem>>, vector<2x32xf32>
    tpu.vector_store %arg2[%c0_3, %c0_4], %3 {strides = array<i32>} : memref<2x32xf32, #tpu.memory_space<vmem>>, vector<2x32xf32>,
    return
  }
  func.func @transform_0(%arg0: i32) -> (i32, i32, i32) {
    %c0_i32 = arith.constant 0 : i32
    %c0_i32_0 = arith.constant 0 : i32
    %c0_i32_1 = arith.constant 0 : i32
    return %arg0, %c0_i32, %c0_i32_0 : i32, i32, i32
  }
  func.func @transform_1(%arg0: i32) -> (i32, i32) {
    %c0_i32 = arith.constant 0 : i32
    %c0_i32_0 = arith.constant 0 : i32
    return %arg0, %c0_i32 : i32, i32
  }
}

</mosaic_0001>

<llo_original>
// kernel: _segment_mean_pallas.1
$region0: #{_segment_mean_pallas.1}
  #allocation0 [shape = 'u32[]', space=smem, size = 0x4, offset = 0x4, fixed_abs, tag = 'smem constant byte address 0x4 - core index']
  #allocation1 [shape = 'u32[144,128]{1,0:T(1,128)}', space=vmem, size = 0x12000, scoped, tag = 'internal scratch']
  %s0 = inlined_call_operand.hbm [shape: f32[2,8,32], index: 0, kind: input, shape index: {}]
  %s1 = inlined_call_operand.hbm [shape: f32[2,32], index: 1, kind: output, shape index: {}]
  %s2 = sld [smem:[#allocation0]]
  $region18: #{_segment_mean_pallas.1} parent=0
    _
  %s4 = ssub.s32 1, %s2
  %s5 = scalar_select 0, %s4, %s2
  $region1: #{_segment_mean_pallas.1} parent=0
    #allocation2 [shape = 'u8[8192]{0}', space=vmem, size = 0x2000, scoped, tag = 'input window, operand 0, single buffered']
    #allocation3 [shape = 's32[1]{0}', space=sflag, size = 0x4, scoped, tag = 'scoped memory for _segment_mean_pallas.1']
    #allocation4 [shape = 's32[1]{0}', space=sflag, size = 0x4, scoped, tag = 'scoped memory for _segment_mean_pallas.1']
    #allocation5 [shape = 'u8[1024]{0}', space=vmem, size = 0x400, scoped, tag = 'output window, operand 0, single buffered']
    %6 = vsyncpa [#allocation3], 0
    %7 = vsyncpa [#allocation4], 0
    // Predicated region
    $region2: #{_segment_mean_pallas.1} parent=1 // pred_check
      _
    $region3: #{_segment_mean_pallas.1} parent=1 // pred_check_branch
      %9 = sbr.rel (0) target = $region5
    $region4: #{_segment_mean_pallas.1} parent=1 // pred_region
      %s11 = ssub.s32 256, 256
      %12 = vsyncadd [#allocation3], %s11
      %s13 = sshll.u32 [#allocation2], 4
      %s14 = int_to_ptr.vmem [resolvable:$true] %s13
      %19 = dma.hbm_to_vmem [thread:$0]  %s0, 256, %s14, [#allocation3], 128, 128, 8
    $region5: #{_segment_mean_pallas.1} parent=1 // pred_fallthru
      _
    // Predicated region
    $region6: #{_segment_mean_pallas.1} parent=1 // pred_check
      _
    $region7: #{_segment_mean_pallas.1} parent=1 // pred_check_branch
      %21 = sbr.rel (0) target = $region9
    $region8: #{_segment_mean_pallas.1} parent=1 // pred_region
      %22 = dma.done [#allocation3], 256
    $region9: #{_segment_mean_pallas.1} parent=1 // pred_fallthru
      _
    %v23 = vld [vmem:[#allocation2] sm:$0xff]
    %v24 = vld [vmem:[#allocation2 + $0x8] sm:$0xff]
    %vm25 = vcmask 261120
    %v26 = vsel %vm25, %v23, 0.0
    %v27 = vrot.slane %v26, 4
    %v28 = vadd.f32 %v26, %v27
    %v29 = vrot.slane %v28, 2
    %v30 = vadd.f32 %v28, %v29
    %v31 = vrot.slane %v30, 1
    %v32 = vadd.f32 %v30, %v31
    %v33 = vsel %vm25, %v24, 0.0
    %v34 = vrot.slane %v33, 4
    %v35 = vadd.f32 %v33, %v34
    %v36 = vrot.slane %v35, 2
    %v37 = vadd.f32 %v35, %v36
    %v38 = vrot.slane %v37, 1
    %v39 = vadd.f32 %v37, %v38
    %v40 = vmul.f32 %v32, 0.125
    %v41 = vmul.f32 %v39, 0.125
    %vm44 = vcmask 1041409
    %v45 = vsel %vm44, %v41, %v40
    %vm47 = vcmask 254976
    %48 = vst.msk [vmem:[#allocation5] sm:$0x3] %vm47, %v45
    // Predicated region
    $region10: #{_segment_mean_pallas.1} parent=1 // pred_check
      _
    $region11: #{_segment_mean_pallas.1} parent=1 // pred_check_branch
      %50 = sbr.rel (0) target = $region13
    $region12: #{_segment_mean_pallas.1} parent=1 // pred_region
      %s52 = ssub.s32 32, 32
      %53 = vsyncadd [#allocation4], %s52
      %s55 = sshll.u32 [#allocation5], 4
      %s56 = int_to_ptr.vmem [resolvable:$true] %s55
      %58 = dma.vmem_to_hbm [thread:$0]  %s56, 32, %s1, [#allocation4]
    $region13: #{_segment_mean_pallas.1} parent=1 // pred_fallthru
      _
    // Predicated region
    $region14: #{_segment_mean_pallas.1} parent=1 // pred_check
      _
    $region15: #{_segment_mean_pallas.1} parent=1 // pred_check_branch
      %60 = sbr.rel (0) target = $region17
    $region16: #{_segment_mean_pallas.1} parent=1 // pred_region
      %61 = dma.done [#allocation4], 32
    $region17: #{_segment_mean_pallas.1} parent=1 // pred_fallthru
      _
    %62 = vsyncpa [#allocation3], 1
    %63 = vsyncpa [#allocation4], 1

</llo_original>
